<compile_context>
chip_gen: v6e
topology: v6e:2x2x1
jax: 0.10.0
libtpu: 0.0.40
codegen_flags: <defaults>
</compile_context>

<pallas_src>
import jax
import jax.numpy as jnp
from jax.experimental import pallas as pl
from jax.experimental.pallas import tpu as pltpu


def _cdiv(a, b):
    return -(-a // b)


def _wiener_kernel(mre_ref, mim_ref, pre_ref, pim_ref, r2re_ref, r2im_ref,
                   ore_ref, oim_ref):
    """out = conj(psf_fft) * meas_fft / (|psf_fft|^2 + reg_param * reg_fft^2)

    r2re/r2im hold the hoisted reg_param * reg_fft**2 (complex square) as a
    single (1, TF) row, broadcast over the batch*channel sublane axis.
    """
    pre = pre_ref[...]
    pim = pim_ref[...]
    mre = mre_ref[...]
    mim = mim_ref[...]
    r2re = r2re_ref[...]          # (1, TF)
    r2im = r2im_ref[...]          # (1, TF)  == Im(denominator)

    # numerator = conj(psf_fft) * meas_fft
    num_re = pre * mre + pim * mim
    num_im = pre * mim - pim * mre

    # denominator = |psf_fft|^2 + reg_param * reg_fft^2  (complex)
    den_re = pre * pre + pim * pim + r2re
    # |den|^2 ; r2im*r2im is only a (1, TF) multiply, broadcast at the add.
    d = den_re * den_re + r2im * r2im

    # EUP approximate reciprocal + one Newton-Raphson step -> ~f32 accuracy.
    inv = pl.reciprocal(d, approx=True)
    inv = inv * (2.0 - d * inv)

    ore_ref[...] = (num_re * den_re + num_im * r2im) * inv
    oim_ref[...] = (num_im * den_re - num_re * r2im) * inv


def _laplacian_2d():
    # Reproduces wienerModel.laplacian(2): [[0,-1,0],[-1,4,-1],[0,-1,0]]
    col = jnp.array([-1.0, 0.0, -1.0], jnp.float32)
    impr = jnp.zeros((3, 3), jnp.float32)
    impr = impr.at[:, 1].set(col)
    impr = impr.at[1, :].set(col)
    impr = impr.at[1, 1].set(4.0)
    return impr


def wiener_forward(meas, psf, reg_param):
    B, C, H, W = meas.shape
    Wf = W // 2 + 1
    BC = B * C
    F = H * Wf

    # TODO(synk): rfft2/irfft2 have no Pallas TPU primitive; the FFTs stay in
    # plain JAX (XLA) while the Wiener elementwise hot path runs in Pallas.
    meas_fft = jnp.fft.rfft2(meas)
    psf_fft = jnp.fft.rfft2(psf, s=(H, W))            # zero-padded to meas size
    reg_fft = jnp.fft.rfft2(_laplacian_2d(), s=(H, W))

    # Hoisted regularizer terms: reg_param * reg_fft**2 (complex square), once.
    lam = reg_param.reshape(()).astype(jnp.float32)
    rre = jnp.real(reg_fft).astype(jnp.float32)
    rim = jnp.imag(reg_fft).astype(jnp.float32)
    reg2_re = (lam * (rre * rre - rim * rim)).reshape(1, F)
    reg2_im = (lam * (2.0 * rre * rim)).reshape(1, F)

    # ---- Tiling ----------------------------------------------------------
    TG = 8                                 # sublane tile along batch*channel
    lane_blocks = _cdiv(F, 128)            # number of 128-lane blocks needed
    max_blocks_per_step = 512              # 8 x 65536 lanes x 4B = 2 MiB/stream
    n_lane_steps = _cdiv(lane_blocks, max_blocks_per_step)
    n_bc_steps = _cdiv(BC, TG)
    # v7x has 2 TensorCores: if the grid would collapse to a single point,
    # split the lane axis so the "parallel" grid can be sharded across cores.
    if n_lane_steps * n_bc_steps < 2 and lane_blocks >= 2:
        n_lane_steps = 2
    TF = 128 * _cdiv(lane_blocks, n_lane_steps)
    Fp = TF * n_lane_steps
    BCp = TG * n_bc_steps

    def plane(x_complex, part, fill=0.0):
        # Fused real/imag -> reshape -> (optional) single pad; no concatenates.
        x = part(x_complex).astype(jnp.float32).reshape(BC, F)
        if BCp == BC and Fp == F:
            return x
        return jnp.pad(x, ((0, BCp - BC), (0, Fp - F)), constant_values=fill)

    mre_p = plane(meas_fft, jnp.real)
    mim_p = plane(meas_fft, jnp.imag)
    # Pad psf_re with 1.0 so the denominator stays non-zero in discarded lanes
    # (padded rows/cols are sliced off after the kernel; any inf/NaN there is
    # never observed).
    pre_p = plane(psf_fft, jnp.real, fill=1.0)
    pim_p = plane(psf_fft, jnp.imag)
    r2re_p = reg2_re if Fp == F else jnp.pad(reg2_re, ((0, 0), (0, Fp - F)))
    r2im_p = reg2_im if Fp == F else jnp.pad(reg2_im, ((0, 0), (0, Fp - F)))

    # Grid order: lane axis SLOW, batch*channel axis FAST -> the broadcast
    # (1, TF) blocks keep index (0, j) across the inner loop (no re-DMA).
    plane_spec = pl.BlockSpec((TG, TF), lambda j, i: (i, j))
    bcast_spec = pl.BlockSpec((1, TF), lambda j, i: (0, j))

    out_re, out_im = pl.pallas_call(
        _wiener_kernel,
        grid=(n_lane_steps, BCp // TG),
        in_specs=[plane_spec, plane_spec,    # meas_fft re/im
                  plane_spec, plane_spec,    # psf_fft re/im
                  bcast_spec, bcast_spec],   # hoisted lam*reg_fft^2 re/im
        out_specs=(plane_spec, plane_spec),
        out_shape=(
            jax.ShapeDtypeStruct((BCp, Fp), jnp.float32),
            jax.ShapeDtypeStruct((BCp, Fp), jnp.float32),
        ),
        compiler_params=pltpu.CompilerParams(
            dimension_semantics=("parallel", "parallel"),
            vmem_limit_bytes=48 * 1024 * 1024),
    )(mre_p, mim_p, pre_p, pim_p, r2re_p, r2im_p)

    filt_fft = (out_re[:BC, :F] + 1j * out_im[:BC, :F]).reshape(B, C, H, Wf)
    deconvolved = jnp.fft.irfft2(filt_fft, s=(H, W))
    # Matches the PyTorch model's hard-coded crop (a no-op when H, W <= 320).
    return deconvolved[:, :, :320, :320]


def wiener_reference(meas, psf, reg_param):
    # Pure-JAX transcription of the PyTorch forward (for verification).
    B, C, H, W = meas.shape
    meas_fft = jnp.fft.rfft2(meas)
    psf_fft = jnp.fft.rfft2(psf, s=(H, W))
    reg = jnp.fft.rfft2(_laplacian_2d(), s=(H, W))[None, None]
    wiener = jnp.conj(psf_fft) / (jnp.abs(psf_fft) ** 2 + reg_param * reg ** 2)
    deconvolved = jnp.fft.irfft2(wiener * meas_fft, s=(H, W))
    return deconvolved[:, :, :320, :320]


if __name__ == "__main__":
    key = jax.random.PRNGKey(0)
    k1, k2 = jax.random.split(key)
    meas = jax.random.normal(k1, (2, 4, 16, 16), jnp.float32)
    psf = jax.random.normal(k2, (2, 4, 16, 16), jnp.float32)
    # Deterministic parameter init: args.reg_param_init = 0.1 -> Parameter (1,)
    reg_param = jnp.full((1,), 0.1, dtype=jnp.float32)

    out = jax.block_until_ready(wiener_forward(meas, psf, reg_param))
    ref = jax.block_until_ready(wiener_reference(meas, psf, reg_param))

    assert out.shape == (2, 4, 16, 16), out.shape
    max_err = float(jnp.max(jnp.abs(out - ref)))
    assert jnp.allclose(out, ref, rtol=1e-4, atol=1e-4), max_err
    print("KERNEL_OK")
</pallas_src>

<mosaic_0001>
module attributes {stable_mosaic.version = 11 : i64} {
  func.func @_wiener_kernel(%arg0: i32, %arg1: i32, %arg2: memref<8x128xf32, #tpu.memory_space<vmem>>, %arg3: memref<8x128xf32, #tpu.memory_space<vmem>>, %arg4: memref<8x128xf32, #tpu.memory_space<vmem>>, %arg5: memref<8x128xf32, #tpu.memory_space<vmem>>, %arg6: memref<1x128xf32, #tpu.memory_space<vmem>>, %arg7: memref<1x128xf32, #tpu.memory_space<vmem>>, %arg8: memref<8x128xf32, #tpu.memory_space<vmem>>, %arg9: memref<8x128xf32, #tpu.memory_space<vmem>>) attributes {dimension_semantics = [#tpu.dimension_semantics<parallel>, #tpu.dimension_semantics<parallel>], iteration_bounds = array<i64: 2, 1>, scalar_prefetch = 0 : i64, scratch_operands = 0 : i64, tpu.core_type = #tpu.core_type<tc>, window_params = [{transform_indices = @transform_0, window_bounds = array<i64: 8, 128>}, {transform_indices = @transform_1, window_bounds = array<i64: 8, 128>}, {transform_indices = @transform_2, window_bounds = array<i64: 8, 128>}, {transform_indices = @transform_3, window_bounds = array<i64: 8, 128>}, {transform_indices = @transform_4, window_bounds = array<i64: 1, 128>}, {transform_indices = @transform_5, window_bounds = array<i64: 1, 128>}, {transform_indices = @transform_6, window_bounds = array<i64: 8, 128>}, {transform_indices = @transform_7, window_bounds = array<i64: 8, 128>}]} {
    %c0 = arith.constant 0 : index
    %c0_0 = arith.constant 0 : index
    %0 = vector.load %arg4[%c0, %c0_0] : memref<8x128xf32, #tpu.memory_space<vmem>>, vector<8x128xf32>
    %c0_1 = arith.constant 0 : index
    %c0_2 = arith.constant 0 : index
    %1 = vector.load %arg5[%c0_1, %c0_2] : memref<8x128xf32, #tpu.memory_space<vmem>>, vector<8x128xf32>
    %c0_3 = arith.constant 0 : index
    %c0_4 = arith.constant 0 : index
    %2 = vector.load %arg2[%c0_3, %c0_4] : memref<8x128xf32, #tpu.memory_space<vmem>>, vector<8x128xf32>
    %c0_5 = arith.constant 0 : index
    %c0_6 = arith.constant 0 : index
    %3 = vector.load %arg3[%c0_5, %c0_6] : memref<8x128xf32, #tpu.memory_space<vmem>>, vector<8x128xf32>
    %c0_7 = arith.constant 0 : index
    %c0_8 = arith.constant 0 : index
    %4 = vector.load %arg6[%c0_7, %c0_8] : memref<1x128xf32, #tpu.memory_space<vmem>>, vector<1x128xf32>
    %c0_9 = arith.constant 0 : index
    %c0_10 = arith.constant 0 : index
    %5 = vector.load %arg7[%c0_9, %c0_10] : memref<1x128xf32, #tpu.memory_space<vmem>>, vector<1x128xf32>
    %6 = arith.mulf %0, %2 : vector<8x128xf32>
    %7 = arith.mulf %1, %3 : vector<8x128xf32>
    %8 = arith.addf %6, %7 : vector<8x128xf32>
    %9 = arith.mulf %0, %3 : vector<8x128xf32>
    %10 = arith.mulf %1, %2 : vector<8x128xf32>
    %11 = arith.subf %9, %10 : vector<8x128xf32>
    %12 = arith.mulf %0, %0 : vector<8x128xf32>
    %13 = arith.mulf %1, %1 : vector<8x128xf32>
    %14 = arith.addf %12, %13 : vector<8x128xf32>
    %15 = vector.broadcast %4 : vector<1x128xf32> to vector<8x128xf32>
    %16 = arith.addf %14, %15 : vector<8x128xf32>
    %17 = arith.mulf %16, %16 : vector<8x128xf32>
    %18 = arith.mulf %5, %5 : vector<1x128xf32>
    %19 = vector.broadcast %18 : vector<1x128xf32> to vector<8x128xf32>
    %20 = arith.addf %17, %19 : vector<8x128xf32>
    %21 = tpu.reciprocal %20 {approx = true} : vector<8x128xf32> -> vector<8x128xf32>
    %22 = arith.mulf %20, %21 : vector<8x128xf32>
    %cst = arith.constant 2.000000e+00 : f32
    %23 = vector.broadcast %cst : f32 to vector<8x128xf32>
    %24 = arith.subf %23, %22 : vector<8x128xf32>
    %25 = arith.mulf %21, %24 : vector<8x128xf32>
    %26 = arith.mulf %8, %16 : vector<8x128xf32>
    %27 = vector.broadcast %5 : vector<1x128xf32> to vector<8x128xf32>
    %28 = arith.mulf %11, %27 : vector<8x128xf32>
    %29 = arith.addf %26, %28 : vector<8x128xf32>
    %30 = arith.mulf %29, %25 : vector<8x128xf32>
    %c0_11 = arith.constant 0 : index
    %c0_12 = arith.constant 0 : index
    %31 = vector.load %arg8[%c0_11, %c0_12] : memref<8x128xf32, #tpu.memory_space<vmem>>, vector<8x128xf32>
    tpu.vector_store %arg8[%c0_11, %c0_12], %30 {strides = array<i32>} : memref<8x128xf32, #tpu.memory_space<vmem>>, vector<8x128xf32>,
    %32 = arith.mulf %11, %16 : vector<8x128xf32>
    %33 = vector.broadcast %5 : vector<1x128xf32> to vector<8x128xf32>
    %34 = arith.mulf %8, %33 : vector<8x128xf32>
    %35 = arith.subf %32, %34 : vector<8x128xf32>
    %36 = arith.mulf %35, %25 : vector<8x128xf32>
    %c0_13 = arith.constant 0 : index
    %c0_14 = arith.constant 0 : index
    %37 = vector.load %arg9[%c0_13, %c0_14] : memref<8x128xf32, #tpu.memory_space<vmem>>, vector<8x128xf32>
    tpu.vector_store %arg9[%c0_13, %c0_14], %36 {strides = array<i32>} : memref<8x128xf32, #tpu.memory_space<vmem>>, vector<8x128xf32>,
    return
  }
  func.func @transform_0(%arg0: i32, %arg1: i32) -> (i32, i32) {
    %c0_i32 = arith.constant 0 : i32
    return %arg1, %arg0 : i32, i32
  }
  func.func @transform_1(%arg0: i32, %arg1: i32) -> (i32, i32) {
    %c0_i32 = arith.constant 0 : i32
    return %arg1, %arg0 : i32, i32
  }
  func.func @transform_2(%arg0: i32, %arg1: i32) -> (i32, i32) {
    %c0_i32 = arith.constant 0 : i32
    return %arg1, %arg0 : i32, i32
  }
  func.func @transform_3(%arg0: i32, %arg1: i32) -> (i32, i32) {
    %c0_i32 = arith.constant 0 : i32
    return %arg1, %arg0 : i32, i32
  }
  func.func @transform_4(%arg0: i32, %arg1: i32) -> (i32, i32) {
    %c0_i32 = arith.constant 0 : i32
    %c0_i32_0 = arith.constant 0 : i32
    return %c0_i32, %arg0 : i32, i32
  }
  func.func @transform_5(%arg0: i32, %arg1: i32) -> (i32, i32) {
    %c0_i32 = arith.constant 0 : i32
    %c0_i32_0 = arith.constant 0 : i32
    return %c0_i32, %arg0 : i32, i32
  }
  func.func @transform_6(%arg0: i32, %arg1: i32) -> (i32, i32) {
    %c0_i32 = arith.constant 0 : i32
    return %arg1, %arg0 : i32, i32
  }
  func.func @transform_7(%arg0: i32, %arg1: i32) -> (i32, i32) {
    %c0_i32 = arith.constant 0 : i32
    return %arg1, %arg0 : i32, i32
  }
}

</mosaic_0001>

<llo_original>
// kernel: tpu_custom_call.1
$region0: #{tpu_custom_call.1}
  #allocation0 [shape = 'u32[]', space=smem, size = 0x4, offset = 0x4, fixed_abs, tag = 'smem constant byte address 0x4 - core index']
  #allocation1 [shape = 'u32[144,128]{1,0:T(1,128)}', space=vmem, size = 0x12000, scoped, tag = 'internal scratch']
  %s0 = inlined_call_operand.hbm [shape: f32[8,256], index: 0, kind: input, shape index: {}]
  %s1 = inlined_call_operand.hbm [shape: f32[8,256], index: 1, kind: input, shape index: {}]
  %s2 = inlined_call_operand.hbm [shape: f32[8,256], index: 2, kind: input, shape index: {}]
  %s3 = inlined_call_operand.hbm [shape: f32[8,256], index: 3, kind: input, shape index: {}]
  %s4 = inlined_call_operand.vmem [shape: f32[1,256], index: 4, kind: input, shape index: {}]
  %s5 = inlined_call_operand.vmem [shape: f32[1,256], index: 5, kind: input, shape index: {}]
  %s6 = inlined_call_operand.hbm [shape: f32[8,256], index: 6, kind: output, shape index: {0}]
  %s7 = inlined_call_operand.hbm [shape: f32[8,256], index: 7, kind: output, shape index: {1}]
  %8 = xla_tuple %s6, %s7
  %s9 = sld [smem:[#allocation0]]
  $region81: #{tpu_custom_call.1} parent=0
    _
  %s11 = ssub.s32 1, %s9
  %s12 = scalar_select 0, %s11, %s9
  $region1: #{tpu_custom_call.1} parent=0
    #allocation2 [shape = 'u8[8192]{0}', space=vmem, size = 0x2000, scoped, tag = 'input window, operand 0']
    #allocation3 [shape = 's32[2]{0}', space=sflag, size = 0x8, scoped, tag = 'scoped memory for tpu_custom_call.1']
    #allocation4 [shape = 's32[2]{0}', space=sflag, size = 0x8, scoped, tag = 'scoped memory for tpu_custom_call.1']
    #allocation5 [shape = 'u8[8192]{0}', space=vmem, size = 0x2000, scoped, tag = 'input window, operand 1']
    #allocation6 [shape = 's32[2]{0}', space=sflag, size = 0x8, scoped, tag = 'scoped memory for tpu_custom_call.1']
    #allocation7 [shape = 'u8[8192]{0}', space=vmem, size = 0x2000, scoped, tag = 'input window, operand 2']
    #allocation8 [shape = 'u8[8192]{0}', space=vmem, size = 0x2000, scoped, tag = 'input window, operand 3']
    #allocation9 [shape = 's32[2]{0}', space=sflag, size = 0x8, scoped, tag = 'scoped memory for tpu_custom_call.1']
    #allocation10 [shape = 'u8[8192]{0}', space=vmem, size = 0x2000, scoped, tag = 'output window, operand 0']
    #allocation11 [shape = 'u8[8192]{0}', space=vmem, size = 0x2000, scoped, tag = 'output window, operand 1']
    #allocation12 [shape = 's32[2]{0}', space=sflag, size = 0x8, scoped, tag = 'scoped memory for tpu_custom_call.1']
    %13 = vsyncpa [#allocation3], 0
    %s14 = scalar_lea.sflag [#allocation3], 1
    %15 = vsyncpa %s14, 0
    %16 = vsyncpa [#allocation6], 0
    %s17 = scalar_lea.sflag [#allocation6], 1
    %18 = vsyncpa %s17, 0
    %19 = vsyncpa [#allocation9], 0
    %s20 = scalar_lea.sflag [#allocation9], 1
    %21 = vsyncpa %s20, 0
    %22 = vsyncpa [#allocation4], 0
    %s23 = scalar_lea.sflag [#allocation4], 1
    %24 = vsyncpa %s23, 0
    %25 = vsyncpa [#allocation12], 0
    %s26 = scalar_lea.sflag [#allocation12], 1
    %27 = vsyncpa %s26, 0
    loop: start=0, step=1, limit=4
    $region2: #{tpu_custom_call.1} parent=1 // loop_pre_header
      _
    $region3: #{tpu_custom_call.1} parent=1 // loop_header
      %s29 = sphi 0, %s33
      %p30 = scmp.ge.s32.totalorder %s29, 4
      %s36 = sphi 0, %s48
      %s37 = sphi 0, %s44
      %s38 = sphi 0, %s36
      %s39 = sphi 0, %s37
      %s40 = sphi 0, %s38
      %s41 = sphi 0, %s39
      %s53 = sphi 0, %s55
      %s56 = sphi 0, %s53
      %s57 = sphi 0, %s56
      %s73 = sphi 0, %s57
      %s81 = sphi 0, %s83
      %s84 = sphi 0, %s81
      %s85 = sphi 0, %s84
      %s101 = sphi 0, %s85
      %s109 = sphi 0, %s111
      %s112 = sphi 0, %s109
      %s113 = sphi 0, %s112
      %s129 = sphi 0, %s113
      %s137 = sphi 0, %s139
      %s140 = sphi 0, %s137
      %s141 = sphi 0, %s140
      %s157 = sphi 0, %s141
      %s163 = sphi 0, %s165
      %s166 = sphi 0, %s163
      %s167 = sphi 0, %s166
      %s183 = sphi 0, %s167
      %s189 = sphi 0, %s191
      %s192 = sphi 0, %s189
      %s193 = sphi 0, %s192
      %s209 = sphi 0, %s193
      %s217 = sphi 0, %s219
      %s220 = sphi 0, %s217
      %s221 = sphi 0, %s220
      %s237 = sphi 0, %s221
      %s245 = sphi 0, %s247
      %s248 = sphi 0, %s245
      %s249 = sphi 0, %s248
      %s265 = sphi 0, %s249
    $region4: #{tpu_custom_call.1} parent=1 // loop_header_branch
      %32 = sbr.rel (%p30) target = $region8
    $region5: #{tpu_custom_call.1} parent=1 // loop_body
      %s34 = ssub.s32 %s29, 1
      %s35 = ssub.s32 %s29, 2
      %s42 = sadd.s32 1, %s37
      %p43 = scmp.ge.s32.totalorder %s42, 1
      %s44 = scalar_select %p43, 0, %s42
      %s45 = sadd.s32 1, %s36
      %s46 = scalar_select %p43, %s45, %s36
      %p47 = scmp.ge.s32.totalorder %s46, 2
      %s48 = scalar_select %p47, 0, %s46
      %s49 = ssub.s32 %s37, %s44
      %s50 = ssub.s32 %s36, %s48
      %s51 = sor.u32 %s49, %s50
      %p52 = scmp.eq.s32.totalorder %s51, 0
      %s54 = sadd.s32 %s53, 1
      %s55 = scalar_select %p52, %s53, %s54
      %p58 = pneg %p52
      %p59 = scmp.eq.s32.totalorder %s29, 1
      %p60 = por %p58, %p59
      %p61 = scmp.ne.s32.totalorder %s53, %s56
      %p62 = scmp.eq.s32.totalorder %s29, 0
      %p63 = por %p61, %p62
      %p64 = scmp.ne.s32.totalorder %s53, %s56
      %p65 = scmp.eq.s32.totalorder %s34, 1
      %p66 = por %p64, %p65
      %p67 = scmp.ne.s32.totalorder %s56, %s57
      %p68 = scmp.eq.s32.totalorder %s34, 0
      %p69 = por %p67, %p68
      %p70 = scmp.ne.s32.totalorder %s56, %s57
      %p71 = scmp.eq.s32.totalorder %s35, 1
      %p72 = por %p70, %p71
      %p74 = scmp.ne.s32.totalorder %s57, %s73
      %p75 = scmp.eq.s32.totalorder %s35, 0
      %p76 = por %p74, %p75
      %s77 = ssub.s32 %s37, %s44
      %s78 = ssub.s32 %s36, %s48
      %s79 = sor.u32 %s77, %s78
      %p80 = scmp.eq.s32.totalorder %s79, 0
      %s82 = sadd.s32 %s81, 1
      %s83 = scalar_select %p80, %s81, %s82
      %p86 = pneg %p80
      %p87 = scmp.eq.s32.totalorder %s29, 1
      %p88 = por %p86, %p87
      %p89 = scmp.ne.s32.totalorder %s81, %s84
      %p90 = scmp.eq.s32.totalorder %s29, 0
      %p91 = por %p89, %p90
      %p92 = scmp.ne.s32.totalorder %s81, %s84
      %p93 = scmp.eq.s32.totalorder %s34, 1
      %p94 = por %p92, %p93
      %p95 = scmp.ne.s32.totalorder %s84, %s85
      %p96 = scmp.eq.s32.totalorder %s34, 0
      %p97 = por %p95, %p96
      %p98 = scmp.ne.s32.totalorder %s84, %s85
      %p99 = scmp.eq.s32.totalorder %s35, 1
      %p100 = por %p98, %p99
      %p102 = scmp.ne.s32.totalorder %s85, %s101
      %p103 = scmp.eq.s32.totalorder %s35, 0
      %p104 = por %p102, %p103
      %s105 = ssub.s32 %s37, %s44
      %s106 = ssub.s32 %s36, %s48
      %s107 = sor.u32 %s105, %s106
      %p108 = scmp.eq.s32.totalorder %s107, 0
      %s110 = sadd.s32 %s109, 1
      %s111 = scalar_select %p108, %s109, %s110
      %p114 = pneg %p108
      %p115 = scmp.eq.s32.totalorder %s29, 1
      %p116 = por %p114, %p115
      %p117 = scmp.ne.s32.totalorder %s109, %s112
      %p118 = scmp.eq.s32.totalorder %s29, 0
      %p119 = por %p117, %p118
      %p120 = scmp.ne.s32.totalorder %s109, %s112
      %p121 = scmp.eq.s32.totalorder %s34, 1
      %p122 = por %p120, %p121
      %p123 = scmp.ne.s32.totalorder %s112, %s113
      %p124 = scmp.eq.s32.totalorder %s34, 0
      %p125 = por %p123, %p124
      %p126 = scmp.ne.s32.totalorder %s112, %s113
      %p127 = scmp.eq.s32.totalorder %s35, 1
      %p128 = por %p126, %p127
      %p130 = scmp.ne.s32.totalorder %s113, %s129
      %p131 = scmp.eq.s32.totalorder %s35, 0
      %p132 = por %p130, %p131
      %s133 = ssub.s32 %s37, %s44
      %s134 = ssub.s32 %s36, %s48
      %s135 = sor.u32 %s133, %s134
      %p136 = scmp.eq.s32.totalorder %s135, 0
      %s138 = sadd.s32 %s137, 1
      %s139 = scalar_select %p136, %s137, %s138
      %p142 = pneg %p136
      %p143 = scmp.eq.s32.totalorder %s29, 1
      %p144 = por %p142, %p143
      %p145 = scmp.ne.s32.totalorder %s137, %s140
      %p146 = scmp.eq.s32.totalorder %s29, 0
      %p147 = por %p145, %p146
      %p148 = scmp.ne.s32.totalorder %s137, %s140
      %p149 = scmp.eq.s32.totalorder %s34, 1
      %p150 = por %p148, %p149
      %p151 = scmp.ne.s32.totalorder %s140, %s141
      %p152 = scmp.eq.s32.totalorder %s34, 0
      %p153 = por %p151, %p152
      %p154 = scmp.ne.s32.totalorder %s140, %s141
      %p155 = scmp.eq.s32.totalorder %s35, 1
      %p156 = por %p154, %p155
      %p158 = scmp.ne.s32.totalorder %s141, %s157
      %p159 = scmp.eq.s32.totalorder %s35, 0
      %p160 = por %p158, %p159
      %s161 = ssub.s32 %s36, %s48
      %p162 = scmp.eq.s32.totalorder %s161, 0
      %s164 = sadd.s32 %s163, 1
      %s165 = scalar_select %p162, %s163, %s164
      %p168 = pneg %p162
      %p169 = scmp.eq.s32.totalorder %s29, 1
      %p170 = por %p168, %p169
      %p171 = scmp.ne.s32.totalorder %s163, %s166
      %p172 = scmp.eq.s32.totalorder %s29, 0
      %p173 = por %p171, %p172
      %p174 = scmp.ne.s32.totalorder %s163, %s166
      %p175 = scmp.eq.s32.totalorder %s34, 1
      %p176 = por %p174, %p175
      %p177 = scmp.ne.s32.totalorder %s166, %s167
      %p178 = scmp.eq.s32.totalorder %s34, 0
      %p179 = por %p177, %p178
      %p180 = scmp.ne.s32.totalorder %s166, %s167
      %p181 = scmp.eq.s32.totalorder %s35, 1
      %p182 = por %p180, %p181
      %p184 = scmp.ne.s32.totalorder %s167, %s183
      %p185 = scmp.eq.s32.totalorder %s35, 0
      %p186 = por %p184, %p185
      %s187 = ssub.s32 %s36, %s48
      %p188 = scmp.eq.s32.totalorder %s187, 0
      %s190 = sadd.s32 %s189, 1
      %s191 = scalar_select %p188, %s189, %s190
      %p194 = pneg %p188
      %p195 = scmp.eq.s32.totalorder %s29, 1
      %p196 = por %p194, %p195
      %p197 = scmp.ne.s32.totalorder %s189, %s192
      %p198 = scmp.eq.s32.totalorder %s29, 0
      %p199 = por %p197, %p198
      %p200 = scmp.ne.s32.totalorder %s189, %s192
      %p201 = scmp.eq.s32.totalorder %s34, 1
      %p202 = por %p200, %p201
      %p203 = scmp.ne.s32.totalorder %s192, %s193
      %p204 = scmp.eq.s32.totalorder %s34, 0
      %p205 = por %p203, %p204
      %p206 = scmp.ne.s32.totalorder %s192, %s193
      %p207 = scmp.eq.s32.totalorder %s35, 1
      %p208 = por %p206, %p207
      %p210 = scmp.ne.s32.totalorder %s193, %s209
      %p211 = scmp.eq.s32.totalorder %s35, 0
      %p212 = por %p210, %p211
      %s213 = ssub.s32 %s37, %s44
      %s214 = ssub.s32 %s36, %s48
      %s215 = sor.u32 %s213, %s214
      %p216 = scmp.eq.s32.totalorder %s215, 0
      %s218 = sadd.s32 %s217, 1
      %s219 = scalar_select %p216, %s217, %s218
      %p222 = pneg %p216
      %p223 = scmp.eq.s32.totalorder %s29, 1
      %p224 = por %p222, %p223
      %p225 = scmp.ne.s32.totalorder %s217, %s220
      %p226 = scmp.eq.s32.totalorder %s29, 0
      %p227 = por %p225, %p226
      %p228 = scmp.ne.s32.totalorder %s217, %s220
      %p229 = scmp.eq.s32.totalorder %s34, 1
      %p230 = por %p228, %p229
      %p231 = scmp.ne.s32.totalorder %s220, %s221
      %p232 = scmp.eq.s32.totalorder %s34, 0
      %p233 = por %p231, %p232
      %p234 = scmp.ne.s32.totalorder %s220, %s221
      %p235 = scmp.eq.s32.totalorder %s35, 1
      %p236 = por %p234, %p235
      %p238 = scmp.ne.s32.totalorder %s221, %s237
      %p239 = scmp.eq.s32.totalorder %s35, 0
      %p240 = por %p238, %p239
      %s241 = ssub.s32 %s37, %s44
      %s242 = ssub.s32 %s36, %s48
      %s243 = sor.u32 %s241, %s242
      %p244 = scmp.eq.s32.totalorder %s243, 0
      %s246 = sadd.s32 %s245, 1
      %s247 = scalar_select %p244, %s245, %s246
      %p250 = pneg %p244
      %p251 = scmp.eq.s32.totalorder %s29, 1
      %p252 = por %p250, %p251
      %p253 = scmp.ne.s32.totalorder %s245, %s248
      %p254 = scmp.eq.s32.totalorder %s29, 0
      %p255 = por %p253, %p254
      %p256 = scmp.ne.s32.totalorder %s245, %s248
      %p257 = scmp.eq.s32.totalorder %s34, 1
      %p258 = por %p256, %p257
      %p259 = scmp.ne.s32.totalorder %s248, %s249
      %p260 = scmp.eq.s32.totalorder %s34, 0
      %p261 = por %p259, %p260
      %p262 = scmp.ne.s32.totalorder %s248, %s249
      %p263 = scmp.eq.s32.totalorder %s35, 1
      %p264 = por %p262, %p263
      %p266 = scmp.ne.s32.totalorder %s249, %s265
      %p267 = scmp.eq.s32.totalorder %s35, 0
      %p268 = por %p266, %p267
      %p269 = scmp.le.s32.totalorder 1, %s29
      %p270 = scmp.lt.s32.totalorder %s29, 3
      %p271 = pnand %p269, %p270
      %p272 = pneg %p271
      // Predicated region
      $region9: #{tpu_custom_call.1} parent=5 // pred_check
        _
      $region10: #{tpu_custom_call.1} parent=5 // pred_check_branch
        %274 = sbr.rel (%p271) target = $region12
      $region11: #{tpu_custom_call.1} parent=5 // pred_region
        %s275 = ssub.s32 %s29, 1
      $region12: #{tpu_custom_call.1} parent=5 // pred_fallthru
        _
      %p276 = scmp.lt.s32.totalorder %s29, 2
      // Predicated region
      $region13: #{tpu_custom_call.1} parent=5 // pred_check
        %p277 = pneg %p276
      $region14: #{tpu_custom_call.1} parent=5 // pred_check_branch
        %279 = sbr.rel (%p277) target = $region16
      $region15: #{tpu_custom_call.1} parent=5 // pred_region
        // Predicated region
        $region17: #{tpu_custom_call.1} parent=15 // pred_check
          %p280 = pneg %p63
        $region18: #{tpu_custom_call.1} parent=15 // pred_check_branch
          %282 = sbr.rel (%p280) target = $region20
        $region19: #{tpu_custom_call.1} parent=15 // pred_region
          %s283 = sand.u32 %s53, 1
          %s284 = scalar_lea.sflag [#allocation3], %s283
          %s285 = sand.u32 %s53, 1
          %s286 = smul.addr %s285, 8
          %s287 = scalar_lea.vmem [#allocation2], %s286
          %s289 = ssub.s32 128, 128
          %290 = vsyncadd %s284, %s289
          %s291 = smul.addr %s37, 2
          %s292 = sadd.s32 %s36, %s291
          %s293 = smul.addr %s292, 128
          %s294 = scalar_lea.hbm %s0, %s293
          %s296 = sshll.u32 %s287, 4
          %s297 = int_to_ptr.vmem [resolvable:$true] %s296
          %299 = dma.hbm_to_vmem [thread:$0]  %s294, 128, %s297, %s284
        $region20: #{tpu_custom_call.1} parent=15 // pred_fallthru
          _
        // Predicated region
        $region21: #{tpu_custom_call.1} parent=15 // pred_check
          %p300 = pneg %p91
        $region22: #{tpu_custom_call.1} parent=15 // pred_check_branch
          %302 = sbr.rel (%p300) target = $region24
        $region23: #{tpu_custom_call.1} parent=15 // pred_region
          %s303 = sand.u32 %s29, 1
          %s304 = scalar_lea.sflag [#allocation6], %s303
          %s305 = sand.u32 %s81, 1
          %s306 = smul.addr %s305, 8
          %s307 = scalar_lea.vmem [#allocation5], %s306
          %s309 = ssub.s32 128, 128
          %310 = vsyncadd %s304, %s309
          %s311 = smul.addr %s37, 2
          %s312 = sadd.s32 %s36, %s311
          %s313 = smul.addr %s312, 128
          %s314 = scalar_lea.hbm %s1, %s313
          %s316 = sshll.u32 %s307, 4
          %s317 = int_to_ptr.vmem [resolvable:$true] %s316
          %319 = dma.hbm_to_vmem [thread:$0]  %s314, 128, %s317, %s304
        $region24: #{tpu_custom_call.1} parent=15 // pred_fallthru
          _
        // Predicated region
        $region25: #{tpu_custom_call.1} parent=15 // pred_check
          %p320 = pneg %p119
        $region26: #{tpu_custom_call.1} parent=15 // pred_check_branch
          %322 = sbr.rel (%p320) target = $region28
        $region27: #{tpu_custom_call.1} parent=15 // pred_region
          %s323 = sand.u32 %s29, 1
          %s324 = scalar_lea.sflag [#allocation6], %s323
          %s325 = sand.u32 %s109, 1
          %s326 = smul.addr %s325, 8
          %s327 = scalar_lea.vmem [#allocation7], %s326
          %s329 = ssub.s32 128, 128
          %330 = vsyncadd %s324, %s329
          %s331 = smul.addr %s37, 2
          %s332 = sadd.s32 %s36, %s331
          %s333 = smul.addr %s332, 128
          %s334 = scalar_lea.hbm %s2, %s333
          %s336 = sshll.u32 %s327, 4
          %s337 = int_to_ptr.vmem [resolvable:$true] %s336
          %339 = dma.hbm_to_vmem [thread:$0]  %s334, 128, %s337, %s324
        $region28: #{tpu_custom_call.1} parent=15 // pred_fallthru
          _
        // Predicated region
        $region29: #{tpu_custom_call.1} parent=15 // pred_check
          %p340 = pneg %p147
        $region30: #{tpu_custom_call.1} parent=15 // pred_check_branch
          %342 = sbr.rel (%p340) target = $region32
        $region31: #{tpu_custom_call.1} parent=15 // pred_region
          %s343 = sand.u32 %s137, 1
          %s344 = scalar_lea.sflag [#allocation9], %s343
          %s345 = sand.u32 %s137, 1
          %s346 = smul.addr %s345, 8
          %s347 = scalar_lea.vmem [#allocation8], %s346
          %s349 = ssub.s32 128, 128
          %350 = vsyncadd %s344, %s349
          %s351 = smul.addr %s37, 2
          %s352 = sadd.s32 %s36, %s351
          %s353 = smul.addr %s352, 128
          %s354 = scalar_lea.hbm %s3, %s353
          %s356 = sshll.u32 %s347, 4
          %s357 = int_to_ptr.vmem [resolvable:$true] %s356
          %359 = dma.hbm_to_vmem [thread:$0]  %s354, 128, %s357, %s344
        $region32: #{tpu_custom_call.1} parent=15 // pred_fallthru
          _
        // Predicated region
        $region33: #{tpu_custom_call.1} parent=15 // pred_check
          %p360 = pneg %p173
        $region34: #{tpu_custom_call.1} parent=15 // pred_check_branch
          %362 = sbr.rel (%p360) target = $region36
        $region35: #{tpu_custom_call.1} parent=15 // pred_region
          %p363 = scmp.lt.s32.totalorder %s36, 1
          %s364 = scalar_select %p363, %s36, 1
          %s365 = scalar_lea.vmem %s4, %s364
        $region36: #{tpu_custom_call.1} parent=15 // pred_fallthru
          _
        // Predicated region
        $region37: #{tpu_custom_call.1} parent=15 // pred_check
          %p366 = pneg %p199
        $region38: #{tpu_custom_call.1} parent=15 // pred_check_branch
          %368 = sbr.rel (%p366) target = $region40
        $region39: #{tpu_custom_call.1} parent=15 // pred_region
          %p369 = scmp.lt.s32.totalorder %s36, 1
          %s370 = scalar_select %p369, %s36, 1
          %s371 = scalar_lea.vmem %s5, %s370
        $region40: #{tpu_custom_call.1} parent=15 // pred_fallthru
          _
      $region16: #{tpu_custom_call.1} parent=5 // pred_fallthru
        _
      %p372 = scmp.le.s32.totalorder 1, %s29
      %p373 = scmp.lt.s32.totalorder %s29, 3
      %p374 = pnand %p372, %p373
      %p375 = pneg %p374
      // Predicated region
      $region41: #{tpu_custom_call.1} parent=5 // pred_check
        _
      $region42: #{tpu_custom_call.1} parent=5 // pred_check_branch
        %377 = sbr.rel (%p374) target = $region44
      $region43: #{tpu_custom_call.1} parent=5 // pred_region
        %s378 = ssub.s32 %s29, 1
        %s379 = sand.u32 %s56, 1
        %s380 = scalar_lea.sflag [#allocation3], %s379
        %s381 = sand.u32 %s56, 1
        %s382 = smul.addr %s381, 8
        %s383 = scalar_lea.vmem [#allocation2], %s382
        // Predicated region
        $region45: #{tpu_custom_call.1} parent=43 // pred_check
          %p384 = pneg %p69
        $region46: #{tpu_custom_call.1} parent=43 // pred_check_branch
          %386 = sbr.rel (%p384) target = $region48
        $region47: #{tpu_custom_call.1} parent=43 // pred_region
          %387 = dma.done %s380, 128
        $region48: #{tpu_custom_call.1} parent=43 // pred_fallthru
          _
        %s388 = sand.u32 %s34, 1
        %s389 = scalar_lea.sflag [#allocation6], %s388
        %s390 = sand.u32 %s84, 1
        %s391 = smul.addr %s390, 8
        %s392 = scalar_lea.vmem [#allocation5], %s391
        // Predicated region
        $region49: #{tpu_custom_call.1} parent=43 // pred_check
          %p393 = pneg %p97
        $region50: #{tpu_custom_call.1} parent=43 // pred_check_branch
          %395 = sbr.rel (%p393) target = $region52
        $region51: #{tpu_custom_call.1} parent=43 // pred_region
          %396 = dma.done %s389, 128
        $region52: #{tpu_custom_call.1} parent=43 // pred_fallthru
          _
        %s397 = sand.u32 %s34, 1
        %s398 = scalar_lea.sflag [#allocation6], %s397
        %s399 = sand.u32 %s112, 1
        %s400 = smul.addr %s399, 8
        %s401 = scalar_lea.vmem [#allocation7], %s400
        // Predicated region
        $region53: #{tpu_custom_call.1} parent=43 // pred_check
          %p402 = pneg %p125
        $region54: #{tpu_custom_call.1} parent=43 // pred_check_branch
          %404 = sbr.rel (%p402) target = $region56
        $region55: #{tpu_custom_call.1} parent=43 // pred_region
          %405 = dma.done %s398, 128
        $region56: #{tpu_custom_call.1} parent=43 // pred_fallthru
          _
        %s406 = sand.u32 %s140, 1
        %s407 = scalar_lea.sflag [#allocation9], %s406
        %s408 = sand.u32 %s140, 1
        %s409 = smul.addr %s408, 8
        %s410 = scalar_lea.vmem [#allocation8], %s409
        // Predicated region
        $region57: #{tpu_custom_call.1} parent=43 // pred_check
          %p411 = pneg %p153
        $region58: #{tpu_custom_call.1} parent=43 // pred_check_branch
          %413 = sbr.rel (%p411) target = $region60
        $region59: #{tpu_custom_call.1} parent=43 // pred_region
          %414 = dma.done %s407, 128
        $region60: #{tpu_custom_call.1} parent=43 // pred_fallthru
          _
        %s415 = sand.u32 %s56, 1
        %s416 = scalar_lea.sflag [#allocation3], %s415
        %s417 = sand.u32 %s56, 1
        %s418 = smul.addr %s417, 8
        %s419 = scalar_lea.vmem [#allocation2], %s418
        %p420 = pneg %p69
        %p421 = pneg %p66
        %s422 = sand.u32 %s34, 1
        %s423 = scalar_lea.sflag [#allocation6], %s422
        %s424 = sand.u32 %s84, 1
        %s425 = smul.addr %s424, 8
        %s426 = scalar_lea.vmem [#allocation5], %s425
        %p427 = pneg %p97
        %p428 = pneg %p94
        %s429 = sand.u32 %s34, 1
        %s430 = scalar_lea.sflag [#allocation6], %s429
        %s431 = sand.u32 %s112, 1
        %s432 = smul.addr %s431, 8
        %s433 = scalar_lea.vmem [#allocation7], %s432
        %p434 = pneg %p125
        %p435 = pneg %p122
        %s436 = sand.u32 %s140, 1
        %s437 = scalar_lea.sflag [#allocation9], %s436
        %s438 = sand.u32 %s140, 1
        %s439 = smul.addr %s438, 8
        %s440 = scalar_lea.vmem [#allocation8], %s439
        %p441 = pneg %p153
        %p442 = pneg %p150
        %p443 = scmp.lt.s32.totalorder %s38, 1
        %s444 = scalar_select %p443, %s38, 1
        %s445 = scalar_lea.vmem %s4, %s444
        %p446 = pneg %p179
        %p447 = pneg %p176
        %p448 = scmp.lt.s32.totalorder %s38, 1
        %s449 = scalar_select %p448, %s38, 1
        %s450 = scalar_lea.vmem %s5, %s449
        %p451 = pneg %p205
        %p452 = pneg %p202
        %p453 = pneg %p233
        %p454 = pneg %p230
        %s455 = sand.u32 %s220, 1
        %s456 = scalar_lea.sflag [#allocation4], %s455
        %s457 = sand.u32 %s220, 1
        %s458 = smul.addr %s457, 8
        %s459 = scalar_lea.vmem [#allocation10], %s458
        %p460 = pneg %p261
        %p461 = pneg %p258
        %s462 = sand.u32 %s248, 1
        %s463 = scalar_lea.sflag [#allocation12], %s462
        %s464 = sand.u32 %s248, 1
        %s465 = smul.addr %s464, 8
        %s466 = scalar_lea.vmem [#allocation11], %s465
        %p467 = scmp.lt.s32.totalorder %s38, 1
        %s468 = scalar_select %p467, %s38, 1
        %s469 = scalar_lea.vmem %s4, %s468
        %p470 = scmp.lt.s32.totalorder %s38, 1
        %s471 = scalar_select %p470, %s38, 1
        %s472 = scalar_lea.vmem %s5, %s471
        %v473 = vld [vmem:[%s401] sm:$0xff]
        %v474 = vld [vmem:[%s410] sm:$0xff]
        %v475 = vld [vmem:[%s383] sm:$0xff]
        %v476 = vld [vmem:[%s392] sm:$0xff]
        %v477 = vld [vmem:[%s469] sm:$0x1]
        %v478 = vld [vmem:[%s472] sm:$0x1]
        %v479 = vmul.f32 %v473, %v475
        %v480 = vmul.f32 %v474, %v476
        %v481 = vadd.f32 %v479, %v480
        %v482 = vmul.f32 %v473, %v476
        %v483 = vmul.f32 %v474, %v475
        %v484 = vsub.f32 %v482, %v483
        %v485 = vmul.f32 %v473, %v473
        %v486 = vmul.f32 %v474, %v474
        %v487 = vadd.f32 %v485, %v486
        %v489 = vlaneseq
        %v490 = vshrl.u32 %v489, 7
        %v491 = vsub.s32 0, %v490
        %v492 = vrot.slane %v477, %v491
        %v494 = vadd.f32 %v487, %v492
        %v495 = vmul.f32 %v494, %v494
        %v496 = vmul.f32 %v478, %v478
        %v498 = vlaneseq
        %v499 = vshrl.u32 %v498, 7
        %v500 = vsub.s32 0, %v499
        %v501 = vrot.slane %v496, %v500
        %v503 = vadd.f32 %v495, %v501
        %v504 = vrcp.pop %v503
        %v505 = vmul.f32 %v503, %v504
        %v506 = vsub.f32 2.0, %v505
        %v507 = vmul.f32 %v504, %v506
        %v508 = vmul.f32 %v481, %v494
        %v510 = vlaneseq
        %v511 = vshrl.u32 %v510, 7
        %v512 = vsub.s32 0, %v511
        %v513 = vrot.slane %v478, %v512
        %v515 = vmul.f32 %v484, %v513
        %v516 = vadd.f32 %v508, %v515
        %v517 = vmul.f32 %v516, %v507
        %518 = vst [vmem:[%s459] sm:$0xff] %v517
        %v519 = vmul.f32 %v484, %v494
        %v520 = vmul.f32 %v481, %v513
        %v521 = vsub.f32 %v519, %v520
        %v522 = vmul.f32 %v521, %v507
        %523 = vst [vmem:[%s466] sm:$0xff] %v522
        %s524 = sand.u32 %s220, 1
        %s525 = scalar_lea.sflag [#allocation4], %s524
        %s526 = sand.u32 %s220, 1
        %s527 = smul.addr %s526, 8
        %s528 = scalar_lea.vmem [#allocation10], %s527
        %s529 = sand.u32 %s248, 1
        %s530 = scalar_lea.sflag [#allocation12], %s529
        %s531 = sand.u32 %s248, 1
        %s532 = smul.addr %s531, 8
        %s533 = scalar_lea.vmem [#allocation11], %s532
        // Predicated region
        $region61: #{tpu_custom_call.1} parent=43 // pred_check
          %p534 = pneg %p230
        $region62: #{tpu_custom_call.1} parent=43 // pred_check_branch
          %536 = sbr.rel (%p534) target = $region64
        $region63: #{tpu_custom_call.1} parent=43 // pred_region
          %s538 = ssub.s32 128, 128
          %539 = vsyncadd %s525, %s538
          %s540 = smul.addr %s39, 2
          %s541 = sadd.s32 %s38, %s540
          %s542 = smul.addr %s541, 128
          %s543 = scalar_lea.hbm %s6, %s542
          %s545 = sshll.u32 %s528, 4
          %s546 = int_to_ptr.vmem [resolvable:$true] %s545
          %548 = dma.vmem_to_hbm [thread:$0]  %s546, 128, %s543, %s525
        $region64: #{tpu_custom_call.1} parent=43 // pred_fallthru
          _
        // Predicated region
        $region65: #{tpu_custom_call.1} parent=43 // pred_check
          %p549 = pneg %p258
        $region66: #{tpu_custom_call.1} parent=43 // pred_check_branch
          %551 = sbr.rel (%p549) target = $region68
        $region67: #{tpu_custom_call.1} parent=43 // pred_region
          %s553 = ssub.s32 128, 128
          %554 = vsyncadd %s530, %s553
          %s555 = smul.addr %s39, 2
          %s556 = sadd.s32 %s38, %s555
          %s557 = smul.addr %s556, 128
          %s558 = scalar_lea.hbm %s7, %s557
          %s560 = sshll.u32 %s533, 4
          %s561 = int_to_ptr.vmem [resolvable:$true] %s560
          %563 = dma.vmem_to_hbm [thread:$0]  %s561, 128, %s558, %s530
        $region68: #{tpu_custom_call.1} parent=43 // pred_fallthru
          _
      $region44: #{tpu_custom_call.1} parent=5 // pred_fallthru
        _
      %p564 = scmp.le.s32.totalorder 2, %s29
      // Predicated region
      $region69: #{tpu_custom_call.1} parent=5 // pred_check
        %p565 = pneg %p564
      $region70: #{tpu_custom_call.1} parent=5 // pred_check_branch
        %567 = sbr.rel (%p565) target = $region72
      $region71: #{tpu_custom_call.1} parent=5 // pred_region
        %s568 = ssub.s32 %s29, 2
        // Predicated region
        $region73: #{tpu_custom_call.1} parent=71 // pred_check
          %p569 = pneg %p236
        $region74: #{tpu_custom_call.1} parent=71 // pred_check_branch
          %571 = sbr.rel (%p569) target = $region76
        $region75: #{tpu_custom_call.1} parent=71 // pred_region
          %s572 = sand.u32 %s221, 1
          %s573 = scalar_lea.sflag [#allocation4], %s572
          %s574 = sand.u32 %s221, 1
          %s575 = smul.addr %s574, 8
          %s576 = scalar_lea.vmem [#allocation10], %s575
          %577 = dma.done %s573, 128
        $region76: #{tpu_custom_call.1} parent=71 // pred_fallthru
          _
        // Predicated region
        $region77: #{tpu_custom_call.1} parent=71 // pred_check
          %p578 = pneg %p264
        $region78: #{tpu_custom_call.1} parent=71 // pred_check_branch
          %580 = sbr.rel (%p578) target = $region80
        $region79: #{tpu_custom_call.1} parent=71 // pred_region
          %s581 = sand.u32 %s249, 1
          %s582 = scalar_lea.sflag [#allocation12], %s581
          %s583 = sand.u32 %s249, 1
          %s584 = smul.addr %s583, 8
          %s585 = scalar_lea.vmem [#allocation11], %s584
          %586 = dma.done %s582, 128
        $region80: #{tpu_custom_call.1} parent=71 // pred_fallthru
          _
      $region72: #{tpu_custom_call.1} parent=5 // pred_fallthru
        _
    $region6: #{tpu_custom_call.1} parent=1 // loop_footer
      %s33 = sadd.s32 1, %s29
    $region7: #{tpu_custom_call.1} parent=1 // loop_footer_branch
      %28 = sbr.rel target = $region3
    $region8: #{tpu_custom_call.1} parent=1 // loop_exit
      _
    %587 = vsyncpa [#allocation3], 1
    %s588 = scalar_lea.sflag [#allocation3], 1
    %589 = vsyncpa %s588, 1
    %590 = vsyncpa [#allocation6], 1
    %s591 = scalar_lea.sflag [#allocation6], 1
    %592 = vsyncpa %s591, 1
    %593 = vsyncpa [#allocation9], 1
    %s594 = scalar_lea.sflag [#allocation9], 1
    %595 = vsyncpa %s594, 1
    %596 = vsyncpa [#allocation4], 1
    %s597 = scalar_lea.sflag [#allocation4], 1
    %598 = vsyncpa %s597, 1
    %599 = vsyncpa [#allocation12], 1
    %s600 = scalar_lea.sflag [#allocation12], 1
    %601 = vsyncpa %s600, 1

</llo_original>
